<compile_context>
chip_gen: v5e
topology: v5e:2x2
jax: 0.10.0
libtpu: 0.0.40
codegen_flags: <defaults>
</compile_context>

<pallas_src>
import functools

import jax
import jax.numpy as jnp
from jax.experimental import pallas as pl
from jax.experimental.pallas import tpu as pltpu


def _round_up(x: int, m: int) -> int:
    return ((x + m - 1) // m) * m


def _embed_block_kernel(ints_ref, table_ref, out_ref, *, min_val: int, max_val: int):
    # ints_ref : (TB, 1) int32 — raw (unclamped) ints for this batch block.
    # table_ref: (V, D)        — full embedding table, resident in VMEM.
    # out_ref  : (TB, D)       — gathered embeddings for this batch block.
    tb = ints_ref.shape[0]
    v = table_ref.shape[0]

    # Clamp in-kernel (keeps the bounds guarantee attached to the gather).
    idx = jnp.clip(ints_ref[...], min_val, max_val) - min_val          # (TB, 1)

    # One-hot gather on the MXU: (TB, V) @ (V, D) -> (TB, D).
    iota_v = jax.lax.broadcasted_iota(jnp.int32, (tb, v), 1)           # (TB, V)
    onehot = (idx == iota_v).astype(table_ref.dtype)                   # (TB, V)
    out_ref[...] = jnp.dot(
        onehot, table_ref[...], preferred_element_type=jnp.float32
    ).astype(out_ref.dtype)


def int_conditioner_forward(ints, embedding_table, *, min_val=0, max_val=512,
                            block_b=None):
    """ints: (B,) integers; embedding_table: (V, D) with V = max_val - min_val + 1.

    Returns [int_embeds (B, 1, D), mask (B, 1) f32] — mirrors the PyTorch list.
    """
    B = int(ints.shape[0])
    V, D = embedding_table.shape
    assert V == max_val - min_val + 1
    ints = ints.astype(jnp.int32)
    dtype_bytes = jnp.dtype(embedding_table.dtype).itemsize

    # Small-batch fast path: a pallas_call launch already exceeds the total
    # data movement here, so use a plain XLA gather.
    if B < 8:
        clamped = jnp.clip(ints, min_val, max_val) - min_val
        emb = embedding_table[clamped][:, None, :]
        return [emb, jnp.ones((B, 1), dtype=jnp.float32)]

    # Pick TB so each step writes a few hundred KB (multiple of 8 sublanes).
    if block_b is None:
        tb_target = _round_up(max(8, (512 * 1024) // max(1, D * dtype_bytes)), 8)
        block_b = min(_round_up(B, 8), tb_target)
    assert block_b % 8 == 0
    TB = block_b
    B_pad = _round_up(B, TB)

    # Pad (any value is safe — the in-kernel clamp maps it to a valid row).
    ints_padded = jnp.pad(ints, (0, B_pad - B)) if B_pad != B else ints
    ints_2d = ints_padded.reshape(B_pad, 1)

    kernel = functools.partial(_embed_block_kernel,
                               min_val=int(min_val), max_val=int(max_val))

    out = pl.pallas_call(
        kernel,
        out_shape=jax.ShapeDtypeStruct((B_pad, D), embedding_table.dtype),
        grid_spec=pltpu.PrefetchScalarGridSpec(
            num_scalar_prefetch=0,
            grid=(B_pad // TB,),
            in_specs=[
                # Raw ints for this batch block (lane dim = full array dim).
                pl.BlockSpec((TB, 1), lambda b: (b, 0)),
                # Full table, constant index_map -> stays resident in VMEM.
                pl.BlockSpec((V, D), lambda b: (0, 0)),
            ],
            out_specs=pl.BlockSpec((TB, D), lambda b: (b, 0)),
        ),
        compiler_params=pltpu.CompilerParams(
            dimension_semantics=("parallel",),
        ),
    )(ints_2d, embedding_table)

    emb = out[:B].reshape(B, 1, D)           # PyTorch's unsqueeze(1)
    mask = jnp.ones((B, 1), dtype=jnp.float32)
    return [emb, mask]


if __name__ == "__main__":
    # Setup consistent with IntConditioner.__init__:
    #   output_dim = D, min_val = 0, max_val = 16 -> embedding table (17, D)
    min_val, max_val = 0, 16
    output_dim = 32
    vocab = max_val - min_val + 1

    key = jax.random.PRNGKey(0)
    k_tab, k_int = jax.random.split(key)

    # nn.Embedding default init ~ N(0, 1)
    embedding_table = jax.random.normal(k_tab, (vocab, output_dim), dtype=jnp.float32)

    # Batch of 16 "ints", some outside [min_val, max_val] to exercise the clamp.
    ints = jax.random.randint(k_int, (16,), -4, max_val + 8, dtype=jnp.int32)

    # Pallas path: block_b=8 -> grid of 2 batch blocks.
    int_embeds, mask = int_conditioner_forward(
        ints, embedding_table, min_val=min_val, max_val=max_val, block_b=8)
    jax.block_until_ready(int_embeds)
    jax.block_until_ready(mask)

    # Reference in plain JAX (same semantics as the PyTorch forward).
    clamped = jnp.clip(ints, min_val, max_val) - min_val
    ref_emb = embedding_table[clamped][:, None, :]
    ref_mask = jnp.ones((ints.shape[0], 1), dtype=jnp.float32)

    assert int_embeds.shape == (16, 1, output_dim)
    assert mask.shape == (16, 1)
    assert jnp.allclose(int_embeds, ref_emb, atol=1e-6)
    assert jnp.allclose(mask, ref_mask)

    # Small-batch dispatch path (plain XLA gather) stays correct too.
    small = jnp.array([3, 0, 25], dtype=jnp.int32)
    s_emb, s_mask = int_conditioner_forward(
        small, embedding_table, min_val=min_val, max_val=max_val)
    s_ref = embedding_table[jnp.clip(small, min_val, max_val) - min_val][:, None, :]
    assert jnp.allclose(s_emb, s_ref, atol=1e-6)
    assert s_mask.shape == (3, 1)

    print("KERNEL_OK")
</pallas_src>

<mosaic_0001>
module attributes {stable_mosaic.version = 11 : i64} {
  func.func @_embed_block_kernel(%arg0: i32, %arg1: memref<8x1xi32, #tpu.memory_space<vmem>>, %arg2: memref<17x32xf32, #tpu.memory_space<vmem>>, %arg3: memref<8x32xf32, #tpu.memory_space<vmem>>) attributes {dimension_semantics = [#tpu.dimension_semantics<parallel>], iteration_bounds = array<i64: 2>, scalar_prefetch = 0 : i64, scratch_operands = 0 : i64, tpu.core_type = #tpu.core_type<tc>, window_params = [{transform_indices = @transform_0, window_bounds = array<i64: 8, 1>}, {pipeline_mode = #tpu.pipeline_mode<synchronous>, transform_indices = @transform_1, window_bounds = array<i64: 17, 32>}, {transform_indices = @transform_2, window_bounds = array<i64: 8, 32>}]} {
    %c0 = arith.constant 0 : index
    %c0_0 = arith.constant 0 : index
    %0 = vector.load %arg1[%c0, %c0_0] : memref<8x1xi32, #tpu.memory_space<vmem>>, vector<8x1xi32>
    %c0_i32 = arith.constant 0 : i32
    %c16_i32 = arith.constant 16 : i32
    %1 = vector.broadcast %c0_i32 : i32 to vector<8x1xi32>
    %2 = arith.maxsi %1, %0 : vector<8x1xi32>
    %3 = vector.broadcast %c16_i32 : i32 to vector<8x1xi32>
    %4 = arith.minsi %3, %2 : vector<8x1xi32>
    %c0_i32_1 = arith.constant 0 : i32
    %5 = vector.broadcast %c0_i32_1 : i32 to vector<8x1xi32>
    %6 = arith.subi %4, %5 : vector<8x1xi32>
    %7 = tpu.iota {dimensions = array<i32: 1>} : vector<8x17xi32>
    %8 = vector.broadcast %6 : vector<8x1xi32> to vector<8x17xi32>
    %9 = arith.cmpi eq, %8, %7 : vector<8x17xi32>
    %10 = arith.extui %9 : vector<8x17xi1> to vector<8x17xi32>
    %11 = arith.sitofp %10 : vector<8x17xi32> to vector<8x17xf32>
    %c0_2 = arith.constant 0 : index
    %c0_3 = arith.constant 0 : index
    %12 = vector.load %arg2[%c0_2, %c0_3] : memref<17x32xf32, #tpu.memory_space<vmem>>, vector<17x32xf32>
    %cst = arith.constant dense<0.000000e+00> : vector<8x32xf32>
    %13 = tpu.matmul %11, %12, %cst {dimension_numbers = #tpu.dot_dimension_numbers<[1], [0], [0], [1], [0, 0, 1, 1], [], []>} : vector<8x17xf32>, vector<17x32xf32>, vector<8x32xf32> -> vector<8x32xf32>
    %c0_4 = arith.constant 0 : index
    %c0_5 = arith.constant 0 : index
    %14 = vector.load %arg3[%c0_4, %c0_5] : memref<8x32xf32, #tpu.memory_space<vmem>>, vector<8x32xf32>
    tpu.vector_store %arg3[%c0_4, %c0_5], %13 {strides = array<i32>} : memref<8x32xf32, #tpu.memory_space<vmem>>, vector<8x32xf32>,
    return
  }
  func.func @transform_0(%arg0: i32) -> (i32, i32) {
    %c0_i32 = arith.constant 0 : i32
    %c0_i32_0 = arith.constant 0 : i32
    return %arg0, %c0_i32 : i32, i32
  }
  func.func @transform_1(%arg0: i32) -> (i32, i32) {
    %c0_i32 = arith.constant 0 : i32
    %c0_i32_0 = arith.constant 0 : i32
    %c0_i32_1 = arith.constant 0 : i32
    return %c0_i32, %c0_i32_0 : i32, i32
  }
  func.func @transform_2(%arg0: i32) -> (i32, i32) {
    %c0_i32 = arith.constant 0 : i32
    %c0_i32_0 = arith.constant 0 : i32
    return %arg0, %c0_i32 : i32, i32
  }
}

</mosaic_0001>

<llo_original>
// kernel: tpu_custom_call.1
$region0: #{tpu_custom_call.1}
  #allocation0 [shape = 'u32[]', space=smem, size = 0x4, offset = 0x4, fixed_abs, tag = 'smem constant byte address 0x4 - core index']
  #allocation1 [shape = 'u32[72,128]{1,0:T(1,128)}', space=vmem, size = 0x9000, scoped, tag = 'internal scratch']
  %s0 = inlined_call_operand.vmem [shape: s32[16,1], index: 0, kind: input, shape index: {}]
  %s1 = inlined_call_operand.hbm [shape: f32[17,32], index: 1, kind: input, shape index: {}]
  %s2 = inlined_call_operand.hbm [shape: f32[16,32], index: 2, kind: output, shape index: {}]
  %s3 = sld [smem:[#allocation0]]
  $region45: #{tpu_custom_call.1} parent=0
    _
  %s5 = ssub.s32 1, %s3
  %s6 = scalar_select 0, %s5, %s3
  $region1: #{tpu_custom_call.1} parent=0
    #allocation2 [shape = 'u8[12288]{0}', space=vmem, size = 0x3000, scoped, tag = 'input window, operand 1, single buffered']
    #allocation3 [shape = 's32[2]{0}', space=sflag, size = 0x8, scoped, tag = 'scoped memory for tpu_custom_call.1']
    #allocation4 [shape = 's32[2]{0}', space=sflag, size = 0x8, scoped, tag = 'scoped memory for tpu_custom_call.1']
    #allocation5 [shape = 'u8[8192]{0}', space=vmem, size = 0x2000, scoped, tag = 'output window, operand 0']
    %7 = vsyncpa [#allocation3], 0
    %8 = vsyncpa [#allocation4], 0
    %s9 = scalar_lea.sflag [#allocation4], 1
    %10 = vsyncpa %s9, 0
    loop: start=0, step=1, limit=4
    $region2: #{tpu_custom_call.1} parent=1 // loop_pre_header
      _
    $region3: #{tpu_custom_call.1} parent=1 // loop_header
      %s12 = sphi 0, %s16
      %p13 = scmp.ge.s32.totalorder %s12, 4
      %s22 = sphi 0, %s24
      %s25 = sphi 0, %s22
      %s26 = sphi 0, %s25
      %s42 = sphi 0, %s26
      %s46 = sphi 0, %s46
      %s48 = sphi 0, %s46
      %s49 = sphi 0, %s48
      %s63 = sphi 0, %s49
      %s69 = sphi 0, %s71
      %s72 = sphi 0, %s69
      %s73 = sphi 0, %s72
      %s89 = sphi 0, %s73
    $region4: #{tpu_custom_call.1} parent=1 // loop_header_branch
      %15 = sbr.rel (%p13) target = $region8
    $region5: #{tpu_custom_call.1} parent=1 // loop_body
      %s17 = ssub.s32 %s12, 1
      %s18 = ssub.s32 %s12, 2
      %s19 = sadd.s32 %s12, 1
      %s20 = ssub.s32 %s12, %s19
      %p21 = scmp.eq.s32.totalorder %s20, 0
      %s23 = sadd.s32 %s22, 1
      %s24 = scalar_select %p21, %s22, %s23
      %p27 = pneg %p21
      %p28 = scmp.eq.s32.totalorder %s12, 1
      %p29 = por %p27, %p28
      %p30 = scmp.ne.s32.totalorder %s22, %s25
      %p31 = scmp.eq.s32.totalorder %s12, 0
      %p32 = por %p30, %p31
      %p33 = scmp.ne.s32.totalorder %s22, %s25
      %p34 = scmp.eq.s32.totalorder %s17, 1
      %p35 = por %p33, %p34
      %p36 = scmp.ne.s32.totalorder %s25, %s26
      %p37 = scmp.eq.s32.totalorder %s17, 0
      %p38 = por %p36, %p37
      %p39 = scmp.ne.s32.totalorder %s25, %s26
      %p40 = scmp.eq.s32.totalorder %s18, 1
      %p41 = por %p39, %p40
      %p43 = scmp.ne.s32.totalorder %s26, %s42
      %p44 = scmp.eq.s32.totalorder %s18, 0
      %p45 = por %p43, %p44
      %s47 = sadd.s32 %s46, 1
      %p50 = scmp.eq.s32.totalorder %s12, 1
      %p51 = scmp.ne.s32.totalorder %s46, %s48
      %p52 = scmp.eq.s32.totalorder %s12, 0
      %p53 = por %p51, %p52
      %p54 = scmp.ne.s32.totalorder %s46, %s48
      %p55 = scmp.eq.s32.totalorder %s17, 1
      %p56 = por %p54, %p55
      %p57 = scmp.ne.s32.totalorder %s48, %s49
      %p58 = scmp.eq.s32.totalorder %s17, 0
      %p59 = por %p57, %p58
      %p60 = scmp.ne.s32.totalorder %s48, %s49
      %p61 = scmp.eq.s32.totalorder %s18, 1
      %p62 = por %p60, %p61
      %p64 = scmp.ne.s32.totalorder %s49, %s63
      %p65 = scmp.eq.s32.totalorder %s18, 0
      %p66 = por %p64, %p65
      %s67 = ssub.s32 %s12, %s19
      %p68 = scmp.eq.s32.totalorder %s67, 0
      %s70 = sadd.s32 %s69, 1
      %s71 = scalar_select %p68, %s69, %s70
      %p74 = pneg %p68
      %p75 = scmp.eq.s32.totalorder %s12, 1
      %p76 = por %p74, %p75
      %p77 = scmp.ne.s32.totalorder %s69, %s72
      %p78 = scmp.eq.s32.totalorder %s12, 0
      %p79 = por %p77, %p78
      %p80 = scmp.ne.s32.totalorder %s69, %s72
      %p81 = scmp.eq.s32.totalorder %s17, 1
      %p82 = por %p80, %p81
      %p83 = scmp.ne.s32.totalorder %s72, %s73
      %p84 = scmp.eq.s32.totalorder %s17, 0
      %p85 = por %p83, %p84
      %p86 = scmp.ne.s32.totalorder %s72, %s73
      %p87 = scmp.eq.s32.totalorder %s18, 1
      %p88 = por %p86, %p87
      %p90 = scmp.ne.s32.totalorder %s73, %s89
      %p91 = scmp.eq.s32.totalorder %s18, 0
      %p92 = por %p90, %p91
      %p93 = scmp.le.s32.totalorder 1, %s12
      %p94 = scmp.lt.s32.totalorder %s12, 3
      %p95 = pnand %p93, %p94
      %p96 = pneg %p95
      // Predicated region
      $region9: #{tpu_custom_call.1} parent=5 // pred_check
        _
      $region10: #{tpu_custom_call.1} parent=5 // pred_check_branch
        %98 = sbr.rel (%p95) target = $region12
      $region11: #{tpu_custom_call.1} parent=5 // pred_region
        %s99 = ssub.s32 %s12, 1
        // Predicated region
        $region13: #{tpu_custom_call.1} parent=11 // pred_check
          %p100 = pneg %p59
        $region14: #{tpu_custom_call.1} parent=11 // pred_check_branch
          %102 = sbr.rel (%p100) target = $region16
        $region15: #{tpu_custom_call.1} parent=11 // pred_region
          %104 = vsyncadd [#allocation3], 0
          %s105 = sshll.u32 %s1, 4
          %s106 = int_to_ptr.hbm [resolvable:$true] %s105
          %s107 = sshll.u32 [#allocation2], 4
          %s108 = int_to_ptr.vmem [resolvable:$true] %s107
          %113 = dma.hbm_to_vmem [thread:$0]  %s106, 384, %s108, [#allocation3], 128, 128, 8
        $region16: #{tpu_custom_call.1} parent=11 // pred_fallthru
          _
      $region12: #{tpu_custom_call.1} parent=5 // pred_fallthru
        _
      %p114 = scmp.lt.s32.totalorder %s12, 2
      // Predicated region
      $region17: #{tpu_custom_call.1} parent=5 // pred_check
        %p115 = pneg %p114
      $region18: #{tpu_custom_call.1} parent=5 // pred_check_branch
        %117 = sbr.rel (%p115) target = $region20
      $region19: #{tpu_custom_call.1} parent=5 // pred_region
        // Predicated region
        $region21: #{tpu_custom_call.1} parent=19 // pred_check
          %p118 = pneg %p32
        $region22: #{tpu_custom_call.1} parent=19 // pred_check_branch
          %120 = sbr.rel (%p118) target = $region24
        $region23: #{tpu_custom_call.1} parent=19 // pred_region
          %p121 = scmp.lt.s32.totalorder %s12, 1
          %s122 = scalar_select %p121, %s12, 1
          %s123 = smul.addr %s122, 8
          %s124 = scalar_lea.vmem %s0, %s123
        $region24: #{tpu_custom_call.1} parent=19 // pred_fallthru
          _
      $region20: #{tpu_custom_call.1} parent=5 // pred_fallthru
        _
      %p125 = scmp.le.s32.totalorder 1, %s12
      %p126 = scmp.lt.s32.totalorder %s12, 3
      %p127 = pnand %p125, %p126
      %p128 = pneg %p127
      // Predicated region
      $region25: #{tpu_custom_call.1} parent=5 // pred_check
        _
      $region26: #{tpu_custom_call.1} parent=5 // pred_check_branch
        %130 = sbr.rel (%p127) target = $region28
      $region27: #{tpu_custom_call.1} parent=5 // pred_region
        %s131 = ssub.s32 %s12, 1
        // Predicated region
        $region29: #{tpu_custom_call.1} parent=27 // pred_check
          %p132 = pneg %p59
        $region30: #{tpu_custom_call.1} parent=27 // pred_check_branch
          %134 = sbr.rel (%p132) target = $region32
        $region31: #{tpu_custom_call.1} parent=27 // pred_region
          %136 = dma.done [#allocation3], 384
        $region32: #{tpu_custom_call.1} parent=27 // pred_fallthru
          _
        %p137 = scmp.lt.s32.totalorder %s17, 1
        %s138 = scalar_select %p137, %s17, 1
        %s139 = smul.addr %s138, 8
        %s140 = scalar_lea.vmem %s0, %s139
        %p141 = pneg %p38
        %p142 = pneg %p35
        %p143 = pneg %p59
        %p144 = pneg %p56
        %p145 = pneg %p85
        %p146 = pneg %p82
        %s147 = sand.u32 %s72, 1
        %s148 = scalar_lea.sflag [#allocation4], %s147
        %s149 = sand.u32 %s72, 1
        %s150 = smul.addr %s149, 8
        %s151 = scalar_lea.vmem [#allocation5], %s150
        %p152 = scmp.lt.s32.totalorder %s17, 1
        %s153 = scalar_select %p152, %s17, 1
        %s154 = smul.addr %s153, 8
        %s155 = scalar_lea.vmem %s0, %s154
        %v156 = vld [vmem:[%s155] sm:$0xff]
        %vm157 = vcmp.gt.s32.totalorder %v156, 0
        %v158 = vsel %vm157, %v156, 0
        %vm159 = vcmp.lt.s32.totalorder %v158, 16
        %v160 = vsel %vm159, %v158, 16
        %v161 = vlaneseq
        %v162 = vand.u32 %v161, 127
        %163 = vset.pattern.permute.xlu0 0
        %164 = vperm.xlu0 %163, %v160
        %v165 = vpop.permute.xlu0 %164
        %vm166 = vcmp.eq.s32.totalorder %v165, %v162
        %v167 = vsel %vm166, 1, 0
        %v168 = vcvt.s32.f32 %v167
        %v169 = vld [vmem:[#allocation2] sm:$0xff]
        %v170 = vld [vmem:[#allocation2 + $0x8] sm:$0xff]
        %v171 = vld [vmem:[#allocation2 + $0x10] sm:$0x1]
        %vm172 = vcmask 138240
        %v174 = vsel %vm172, %v168, 0
        %vm176 = vcmask 1040384
        %v178 = vsel %vm176, %v171, 0
        %180 = vmatpush.msra.mxu0 0.0
        %181 = vmatpush.msra.mxu0 0.0
        %182 = vmatpush.msra.mxu0 0.0
        %183 = vmatpush.msra.mxu0 0.0
        %184 = vmatpush.msra.mxu0 0.0
        %185 = vmatpush.msra.mxu0 0.0
        %186 = vmatpush.msra.mxu0 0.0
        %187 = vmatpush.msra.mxu0 0.0
        %188 = vmatpush.msra.mxu0 0.0
        %189 = vmatpush.msra.mxu0 0.0
        %190 = vmatpush.msra.mxu0 0.0
        %191 = vmatpush.msra.mxu0 0.0
        %192 = vmatpush.msra.mxu0 0.0
        %193 = vmatpush.msra.mxu0 %v178
        %194 = vmatpush.msra.mxu0 %v170
        %195 = vmatpush.msra.mxu0 %v169
        %196 = vmatmul.f32.gmra.mxu0 %v174
        %v197 = vpop.f32.mrf.mxu0
        %v198 = vadd.f32 0.0, %v197
        %199 = vdwg.mxu0
        %vm200 = vcmask 261120
        %201 = vst.msk [vmem:[%s151] sm:$0xff] %vm200, %v198
        %s202 = sand.u32 %s72, 1
        %s203 = scalar_lea.sflag [#allocation4], %s202
        %s204 = sand.u32 %s72, 1
        %s205 = smul.addr %s204, 8
        %s206 = scalar_lea.vmem [#allocation5], %s205
        // Predicated region
        $region33: #{tpu_custom_call.1} parent=27 // pred_check
          %p207 = pneg %p82
        $region34: #{tpu_custom_call.1} parent=27 // pred_check_branch
          %209 = sbr.rel (%p207) target = $region36
        $region35: #{tpu_custom_call.1} parent=27 // pred_region
          %211 = vsyncadd %s203, 0
          %s212 = smul.addr %s17, 8
          %s213 = scalar_lea.hbm %s2, %s212
          %s215 = sshll.u32 %s206, 4
          %s216 = int_to_ptr.vmem [resolvable:$true] %s215
          %s217 = sshll.u32 %s213, 4
          %s218 = int_to_ptr.hbm [resolvable:$true] %s217
          %220 = dma.vmem_to_hbm [thread:$0]  %s216, 128, %s218, %s203
        $region36: #{tpu_custom_call.1} parent=27 // pred_fallthru
          _
      $region28: #{tpu_custom_call.1} parent=5 // pred_fallthru
        _
      %p221 = scmp.le.s32.totalorder 2, %s12
      // Predicated region
      $region37: #{tpu_custom_call.1} parent=5 // pred_check
        %p222 = pneg %p221
      $region38: #{tpu_custom_call.1} parent=5 // pred_check_branch
        %224 = sbr.rel (%p222) target = $region40
      $region39: #{tpu_custom_call.1} parent=5 // pred_region
        %s225 = ssub.s32 %s12, 2
        // Predicated region
        $region41: #{tpu_custom_call.1} parent=39 // pred_check
          %p226 = pneg %p88
        $region42: #{tpu_custom_call.1} parent=39 // pred_check_branch
          %228 = sbr.rel (%p226) target = $region44
        $region43: #{tpu_custom_call.1} parent=39 // pred_region
          %s229 = sand.u32 %s73, 1
          %s230 = scalar_lea.sflag [#allocation4], %s229
          %s231 = sand.u32 %s73, 1
          %s232 = smul.addr %s231, 8
          %s233 = scalar_lea.vmem [#allocation5], %s232
          %235 = dma.done %s230, 128
        $region44: #{tpu_custom_call.1} parent=39 // pred_fallthru
          _
      $region40: #{tpu_custom_call.1} parent=5 // pred_fallthru
        _
    $region6: #{tpu_custom_call.1} parent=1 // loop_footer
      %s16 = sadd.s32 1, %s12
    $region7: #{tpu_custom_call.1} parent=1 // loop_footer_branch
      %11 = sbr.rel target = $region3
    $region8: #{tpu_custom_call.1} parent=1 // loop_exit
      _
    %236 = vsyncpa [#allocation3], 1
    %s237 = scalar_lea.sflag [#allocation3], 1
    %238 = vsyncpa %s237, 1
    %239 = vsyncpa [#allocation4], 1
    %s240 = scalar_lea.sflag [#allocation4], 1
    %241 = vsyncpa %s240, 1

</llo_original>
